<compile_context>
chip_gen: v7x
topology: tpu7x:2x2x1
jax: 0.10.0
libtpu: 0.0.40
codegen_flags: <defaults>
</compile_context>

<pallas_src>
import functools

import jax
import jax.numpy as jnp
from jax.experimental import pallas as pl
from jax.experimental.pallas import tpu as pltpu

SUBLANE = 8  # f32 sublane count


def _round_up(x, m):
    return ((x + m - 1) // m) * m


def _diag_gaussian_mean_kernel(x_ref, w_ref, b_ref, mean_ref):
    # mean = x @ W + b, with W pre-transposed to [K, N] and bias [1, N].
    acc = jnp.dot(x_ref[...], w_ref[...], preferred_element_type=jnp.float32)
    mean_ref[...] = (acc + b_ref[...]).astype(mean_ref.dtype)


def prepare_diag_gaussian_params(weight, bias, logstd):
    """One-time parameter preparation (hoisted out of the per-call path).

    weight: [N, K]  (PyTorch nn.Linear layout) -> pre-transposed [K, N]
    bias:   [N]                                -> [1, N]
    logstd: [N]                                -> scale row exp(logstd), shape [1, N]
    """
    N, _ = weight.shape
    w_t = weight.T.astype(jnp.float32)
    b_row = bias.astype(jnp.float32).reshape(1, N)
    scale_row = jnp.exp(logstd.astype(jnp.float32)).reshape(1, N)
    return w_t, b_row, scale_row


@functools.partial(jax.jit, static_argnames=("block_b", "min_pallas_batch"))
def diag_gaussian_forward(x, w_t, b_row, scale_row, *, block_b=4096,
                          min_pallas_batch=256):
    """x: [B, K] f32. Returns (mean [B, N], scale [B, N]) of the diagonal Gaussian."""
    B, K = x.shape
    N = w_t.shape[1]

    if B < min_pallas_batch:
        # Tiny batches: a single-step Pallas launch is pure overhead vs the
        # fused XLA matmul. Semantics are identical.
        mean = (x @ w_t + b_row).astype(jnp.float32)
    else:
        # Batch tile: multiple of the sublane count, capped at block_b to keep
        # per-step VMEM modest, and chosen from ceil(B/2) so the grid always
        # has >= 2 steps (lets v7x shard the parallel axis over its 2 TCs).
        TB = max(SUBLANE, min(block_b, _round_up(pl.cdiv(B, 2), SUBLANE)))
        grid = (pl.cdiv(B, TB),)  # ragged last block: OOB reads only feed dropped rows

        mean = pl.pallas_call(
            _diag_gaussian_mean_kernel,
            out_shape=jax.ShapeDtypeStruct((B, N), jnp.float32),
            grid_spec=pltpu.PrefetchScalarGridSpec(
                num_scalar_prefetch=0,
                grid=grid,
                in_specs=[
                    pl.BlockSpec((TB, K), lambda i: (i, 0)),  # x batch tile (K == full dim)
                    pl.BlockSpec((K, N), lambda i: (0, 0)),   # weight, resident every step
                    pl.BlockSpec((1, N), lambda i: (0, 0)),   # bias row, resident
                ],
                out_specs=pl.BlockSpec((TB, N), lambda i: (i, 0)),  # real-width output, no pad
            ),
            compiler_params=pltpu.CompilerParams(
                dimension_semantics=("parallel",),  # 2-TC sharding on v7x
                vmem_limit_bytes=32 * 1024 * 1024,
            ),
        )(x, w_t, b_row)

    # Scale does not depend on x: broadcast the precomputed (1, N) row lazily
    # instead of storing B identical rows from the kernel.
    scale = jnp.broadcast_to(scale_row, mean.shape)
    return mean, scale


def _orthogonal_init(key, shape, gain):
    """Deterministic orthogonal init (matches nn.init.orthogonal_ semantics)."""
    rows, cols = shape
    flat = jax.random.normal(key, (max(rows, cols), min(rows, cols)), dtype=jnp.float32)
    q, r = jnp.linalg.qr(flat)
    d = jnp.sign(jnp.diag(r))
    q = q * d[None, :]
    if rows < cols:
        q = q.T
    return gain * q[:rows, :cols]


if __name__ == "__main__":
    key = jax.random.PRNGKey(0)
    k_w, k_x1, k_x2, k_x3 = jax.random.split(key, 4)

    num_inputs = 32
    num_outputs = 16

    # Parameters (deterministic, mirroring DiagGaussian.__init__):
    #   fc_mean.weight: orthogonal init, gain=0.01 ; fc_mean.bias: zeros
    #   logstd (AddBias): zeros(num_outputs)
    weight = _orthogonal_init(k_w, (num_outputs, num_inputs), gain=0.01)
    bias = jnp.zeros((num_outputs,), dtype=jnp.float32)
    logstd = jnp.zeros((num_outputs,), dtype=jnp.float32)

    w_t, b_row, scale_row = prepare_diag_gaussian_params(weight, bias, logstd)

    def reference(xv):
        m = xv @ weight.T + bias[None, :]
        s = jnp.broadcast_to(jnp.exp(logstd)[None, :], m.shape)
        return m, s

    # 1) Pallas path forced at a small batch: 2-step grid with a ragged last block.
    x1 = jax.random.normal(k_x1, (13, num_inputs), dtype=jnp.float32)
    mean1, scale1 = diag_gaussian_forward(x1, w_t, b_row, scale_row,
                                          min_pallas_batch=0)
    jax.block_until_ready((mean1, scale1))
    m_ref1, s_ref1 = reference(x1)
    assert mean1.shape == (13, num_outputs) and scale1.shape == (13, num_outputs)
    assert jnp.allclose(mean1, m_ref1, atol=1e-5, rtol=1e-5)
    assert jnp.allclose(scale1, s_ref1, atol=1e-6, rtol=1e-6)

    # 2) Pallas path with default params: multi-step grid, ragged against TB.
    x2 = jax.random.normal(k_x2, (1037, num_inputs), dtype=jnp.float32)
    mean2, scale2 = diag_gaussian_forward(x2, w_t, b_row, scale_row)
    jax.block_until_ready((mean2, scale2))
    m_ref2, s_ref2 = reference(x2)
    assert jnp.allclose(mean2, m_ref2, atol=1e-5, rtol=1e-5)
    assert jnp.allclose(scale2, s_ref2, atol=1e-6, rtol=1e-6)

    # 3) Small-batch fallback path (plain XLA matmul), semantics identical.
    x3 = jax.random.normal(k_x3, (8, num_inputs), dtype=jnp.float32)
    mean3, scale3 = diag_gaussian_forward(x3, w_t, b_row, scale_row)
    jax.block_until_ready((mean3, scale3))
    m_ref3, s_ref3 = reference(x3)
    assert jnp.allclose(mean3, m_ref3, atol=1e-5, rtol=1e-5)
    assert jnp.allclose(scale3, s_ref3, atol=1e-6, rtol=1e-6)

    print("KERNEL_OK")
</pallas_src>

<mosaic_0001>
module attributes {stable_mosaic.version = 11 : i64} {
  func.func @_diag_gaussian_mean_kernel(%arg0: i32, %arg1: memref<8x32xf32, #tpu.memory_space<vmem>>, %arg2: memref<32x16xf32, #tpu.memory_space<vmem>>, %arg3: memref<1x16xf32, #tpu.memory_space<vmem>>, %arg4: memref<8x16xf32, #tpu.memory_space<vmem>>) attributes {dimension_semantics = [#tpu.dimension_semantics<parallel>], iteration_bounds = array<i64: 2>, scalar_prefetch = 0 : i64, scratch_operands = 0 : i64, tpu.core_type = #tpu.core_type<tc>, window_params = [{transform_indices = @transform_0, window_bounds = array<i64: 8, 32>}, {pipeline_mode = #tpu.pipeline_mode<synchronous>, transform_indices = @transform_1, window_bounds = array<i64: 32, 16>}, {pipeline_mode = #tpu.pipeline_mode<synchronous>, transform_indices = @transform_2, window_bounds = array<i64: 1, 16>}, {transform_indices = @transform_3, window_bounds = array<i64: 8, 16>}]} {
    %c0 = arith.constant 0 : index
    %c0_0 = arith.constant 0 : index
    %0 = vector.load %arg1[%c0, %c0_0] : memref<8x32xf32, #tpu.memory_space<vmem>>, vector<8x32xf32>
    %c0_1 = arith.constant 0 : index
    %c0_2 = arith.constant 0 : index
    %1 = vector.load %arg2[%c0_1, %c0_2] : memref<32x16xf32, #tpu.memory_space<vmem>>, vector<32x16xf32>
    %cst = arith.constant dense<0.000000e+00> : vector<8x16xf32>
    %2 = tpu.matmul %0, %1, %cst {dimension_numbers = #tpu.dot_dimension_numbers<[1], [0], [0], [1], [0, 0, 1, 1], [], []>} : vector<8x32xf32>, vector<32x16xf32>, vector<8x16xf32> -> vector<8x16xf32>
    %c0_3 = arith.constant 0 : index
    %c0_4 = arith.constant 0 : index
    %3 = vector.load %arg3[%c0_3, %c0_4] : memref<1x16xf32, #tpu.memory_space<vmem>>, vector<1x16xf32>
    %4 = vector.broadcast %3 : vector<1x16xf32> to vector<8x16xf32>
    %5 = arith.addf %2, %4 : vector<8x16xf32>
    %c0_5 = arith.constant 0 : index
    %c0_6 = arith.constant 0 : index
    %6 = vector.load %arg4[%c0_5, %c0_6] : memref<8x16xf32, #tpu.memory_space<vmem>>, vector<8x16xf32>
    tpu.vector_store %arg4[%c0_5, %c0_6], %5 {strides = array<i32>} : memref<8x16xf32, #tpu.memory_space<vmem>>, vector<8x16xf32>,
    return
  }
  func.func @transform_0(%arg0: i32) -> (i32, i32) {
    %c0_i32 = arith.constant 0 : i32
    %c0_i32_0 = arith.constant 0 : i32
    return %arg0, %c0_i32 : i32, i32
  }
  func.func @transform_1(%arg0: i32) -> (i32, i32) {
    %c0_i32 = arith.constant 0 : i32
    %c0_i32_0 = arith.constant 0 : i32
    %c0_i32_1 = arith.constant 0 : i32
    return %c0_i32, %c0_i32_0 : i32, i32
  }
  func.func @transform_2(%arg0: i32) -> (i32, i32) {
    %c0_i32 = arith.constant 0 : i32
    %c0_i32_0 = arith.constant 0 : i32
    %c0_i32_1 = arith.constant 0 : i32
    return %c0_i32, %c0_i32_0 : i32, i32
  }
  func.func @transform_3(%arg0: i32) -> (i32, i32) {
    %c0_i32 = arith.constant 0 : i32
    %c0_i32_0 = arith.constant 0 : i32
    return %arg0, %c0_i32 : i32, i32
  }
}

</mosaic_0001>

<llo_original>
// kernel: diag_gaussian_forward.1
$region0: #{diag_gaussian_forward.1}
  #allocation0 [shape = 'u32[]', space=smem, size = 0x4, offset = 0x4, fixed_abs, tag = 'smem constant byte address 0x4 - core index']
  #allocation1 [shape = 'u32[144,128]{1,0:T(1,128)}', space=vmem, size = 0x12000, scoped, tag = 'internal scratch']
  %s0 = inlined_call_operand.vmem [shape: f32[13,32], index: 0, kind: input, shape index: {}]
  %s1 = inlined_call_operand.vmem [shape: f32[32,16], index: 1, kind: input, shape index: {}]
  %s2 = inlined_call_operand.vmem [shape: f32[1,16], index: 2, kind: input, shape index: {}]
  %s3 = inlined_call_operand.hbm [shape: f32[13,16], index: 3, kind: output, shape index: {}]
  %s4 = sld [smem:[#allocation0]]
  $region45: #{diag_gaussian_forward.1} parent=0
    _
  %s6 = ssub.s32 1, %s4
  %s7 = scalar_select 0, %s6, %s4
  $region1: #{diag_gaussian_forward.1} parent=0
    #allocation2 [shape = 'u8[8192]{0}', space=vmem, size = 0x2000, scoped, tag = 'output window, operand 0']
    #allocation3 [shape = 's32[2]{0}', space=sflag, size = 0x8, scoped, tag = 'scoped memory for diag_gaussian_forward.1']
    %8 = vsyncpa [#allocation3], 0
    %s9 = scalar_lea.sflag [#allocation3], 1
    %10 = vsyncpa %s9, 0
    loop: start=0, step=1, limit=4
    $region2: #{diag_gaussian_forward.1} parent=1 // loop_pre_header
      _
    $region3: #{diag_gaussian_forward.1} parent=1 // loop_header
      %s12 = sphi 0, %s16
      %p13 = scmp.ge.s32.totalorder %s12, 4
      %s22 = sphi 0, %s24
      %s25 = sphi 0, %s22
      %s26 = sphi 0, %s25
      %s42 = sphi 0, %s26
      %s46 = sphi 0, %s46
      %s48 = sphi 0, %s46
      %s49 = sphi 0, %s48
      %s63 = sphi 0, %s49
      %s67 = sphi 0, %s67
      %s69 = sphi 0, %s67
      %s70 = sphi 0, %s69
      %s84 = sphi 0, %s70
      %s90 = sphi 0, %s92
      %s93 = sphi 0, %s90
      %s94 = sphi 0, %s93
      %s110 = sphi 0, %s94
    $region4: #{diag_gaussian_forward.1} parent=1 // loop_header_branch
      %15 = sbr.rel (%p13) target = $region8
    $region5: #{diag_gaussian_forward.1} parent=1 // loop_body
      %s17 = ssub.s32 %s12, 1
      %s18 = ssub.s32 %s12, 2
      %s19 = sadd.s32 %s12, 1
      %s20 = ssub.s32 %s12, %s19
      %p21 = scmp.eq.s32.totalorder %s20, 0
      %s23 = sadd.s32 %s22, 1
      %s24 = scalar_select %p21, %s22, %s23
      %p27 = pneg %p21
      %p28 = scmp.eq.s32.totalorder %s12, 1
      %p29 = por %p27, %p28
      %p30 = scmp.ne.s32.totalorder %s22, %s25
      %p31 = scmp.eq.s32.totalorder %s12, 0
      %p32 = por %p30, %p31
      %p33 = scmp.ne.s32.totalorder %s22, %s25
      %p34 = scmp.eq.s32.totalorder %s17, 1
      %p35 = por %p33, %p34
      %p36 = scmp.ne.s32.totalorder %s25, %s26
      %p37 = scmp.eq.s32.totalorder %s17, 0
      %p38 = por %p36, %p37
      %p39 = scmp.ne.s32.totalorder %s25, %s26
      %p40 = scmp.eq.s32.totalorder %s18, 1
      %p41 = por %p39, %p40
      %p43 = scmp.ne.s32.totalorder %s26, %s42
      %p44 = scmp.eq.s32.totalorder %s18, 0
      %p45 = por %p43, %p44
      %s47 = sadd.s32 %s46, 1
      %p50 = scmp.eq.s32.totalorder %s12, 1
      %p51 = scmp.ne.s32.totalorder %s46, %s48
      %p52 = scmp.eq.s32.totalorder %s12, 0
      %p53 = por %p51, %p52
      %p54 = scmp.ne.s32.totalorder %s46, %s48
      %p55 = scmp.eq.s32.totalorder %s17, 1
      %p56 = por %p54, %p55
      %p57 = scmp.ne.s32.totalorder %s48, %s49
      %p58 = scmp.eq.s32.totalorder %s17, 0
      %p59 = por %p57, %p58
      %p60 = scmp.ne.s32.totalorder %s48, %s49
      %p61 = scmp.eq.s32.totalorder %s18, 1
      %p62 = por %p60, %p61
      %p64 = scmp.ne.s32.totalorder %s49, %s63
      %p65 = scmp.eq.s32.totalorder %s18, 0
      %p66 = por %p64, %p65
      %s68 = sadd.s32 %s67, 1
      %p71 = scmp.eq.s32.totalorder %s12, 1
      %p72 = scmp.ne.s32.totalorder %s67, %s69
      %p73 = scmp.eq.s32.totalorder %s12, 0
      %p74 = por %p72, %p73
      %p75 = scmp.ne.s32.totalorder %s67, %s69
      %p76 = scmp.eq.s32.totalorder %s17, 1
      %p77 = por %p75, %p76
      %p78 = scmp.ne.s32.totalorder %s69, %s70
      %p79 = scmp.eq.s32.totalorder %s17, 0
      %p80 = por %p78, %p79
      %p81 = scmp.ne.s32.totalorder %s69, %s70
      %p82 = scmp.eq.s32.totalorder %s18, 1
      %p83 = por %p81, %p82
      %p85 = scmp.ne.s32.totalorder %s70, %s84
      %p86 = scmp.eq.s32.totalorder %s18, 0
      %p87 = por %p85, %p86
      %s88 = ssub.s32 %s12, %s19
      %p89 = scmp.eq.s32.totalorder %s88, 0
      %s91 = sadd.s32 %s90, 1
      %s92 = scalar_select %p89, %s90, %s91
      %p95 = pneg %p89
      %p96 = scmp.eq.s32.totalorder %s12, 1
      %p97 = por %p95, %p96
      %p98 = scmp.ne.s32.totalorder %s90, %s93
      %p99 = scmp.eq.s32.totalorder %s12, 0
      %p100 = por %p98, %p99
      %p101 = scmp.ne.s32.totalorder %s90, %s93
      %p102 = scmp.eq.s32.totalorder %s17, 1
      %p103 = por %p101, %p102
      %p104 = scmp.ne.s32.totalorder %s93, %s94
      %p105 = scmp.eq.s32.totalorder %s17, 0
      %p106 = por %p104, %p105
      %p107 = scmp.ne.s32.totalorder %s93, %s94
      %p108 = scmp.eq.s32.totalorder %s18, 1
      %p109 = por %p107, %p108
      %p111 = scmp.ne.s32.totalorder %s94, %s110
      %p112 = scmp.eq.s32.totalorder %s18, 0
      %p113 = por %p111, %p112
      %p114 = scmp.le.s32.totalorder 1, %s12
      %p115 = scmp.lt.s32.totalorder %s12, 3
      %p116 = pnand %p114, %p115
      %p117 = pneg %p116
      // Predicated region
      $region9: #{diag_gaussian_forward.1} parent=5 // pred_check
        _
      $region10: #{diag_gaussian_forward.1} parent=5 // pred_check_branch
        %119 = sbr.rel (%p116) target = $region12
      $region11: #{diag_gaussian_forward.1} parent=5 // pred_region
        %s120 = ssub.s32 %s12, 1
        // Predicated region
        $region13: #{diag_gaussian_forward.1} parent=11 // pred_check
          %p121 = pneg %p59
        $region14: #{diag_gaussian_forward.1} parent=11 // pred_check_branch
          %123 = sbr.rel (%p121) target = $region16
        $region15: #{diag_gaussian_forward.1} parent=11 // pred_region
          _
        $region16: #{diag_gaussian_forward.1} parent=11 // pred_fallthru
          _
        // Predicated region
        $region17: #{diag_gaussian_forward.1} parent=11 // pred_check
          %p124 = pneg %p80
        $region18: #{diag_gaussian_forward.1} parent=11 // pred_check_branch
          %126 = sbr.rel (%p124) target = $region20
        $region19: #{diag_gaussian_forward.1} parent=11 // pred_region
          _
        $region20: #{diag_gaussian_forward.1} parent=11 // pred_fallthru
          _
      $region12: #{diag_gaussian_forward.1} parent=5 // pred_fallthru
        _
      %p127 = scmp.lt.s32.totalorder %s12, 2
      // Predicated region
      $region21: #{diag_gaussian_forward.1} parent=5 // pred_check
        %p128 = pneg %p127
      $region22: #{diag_gaussian_forward.1} parent=5 // pred_check_branch
        %130 = sbr.rel (%p128) target = $region24
      $region23: #{diag_gaussian_forward.1} parent=5 // pred_region
        // Predicated region
        $region25: #{diag_gaussian_forward.1} parent=23 // pred_check
          %p131 = pneg %p32
        $region26: #{diag_gaussian_forward.1} parent=23 // pred_check_branch
          %133 = sbr.rel (%p131) target = $region28
        $region27: #{diag_gaussian_forward.1} parent=23 // pred_region
          %p134 = scmp.lt.s32.totalorder %s12, 1
          %s135 = scalar_select %p134, %s12, 1
          %s136 = smul.addr %s135, 8
          %s137 = scalar_lea.vmem %s0, %s136
        $region28: #{diag_gaussian_forward.1} parent=23 // pred_fallthru
          _
      $region24: #{diag_gaussian_forward.1} parent=5 // pred_fallthru
        _
      %p138 = scmp.le.s32.totalorder 1, %s12
      %p139 = scmp.lt.s32.totalorder %s12, 3
      %p140 = pnand %p138, %p139
      %p141 = pneg %p140
      // Predicated region
      $region29: #{diag_gaussian_forward.1} parent=5 // pred_check
        _
      $region30: #{diag_gaussian_forward.1} parent=5 // pred_check_branch
        %143 = sbr.rel (%p140) target = $region32
      $region31: #{diag_gaussian_forward.1} parent=5 // pred_region
        %s144 = ssub.s32 %s12, 1
        %p145 = scmp.lt.s32.totalorder %s17, 1
        %s146 = scalar_select %p145, %s17, 1
        %s147 = smul.addr %s146, 8
        %s148 = scalar_lea.vmem %s0, %s147
        %p149 = pneg %p38
        %p150 = pneg %p35
        %p151 = pneg %p59
        %p152 = pneg %p56
        %p153 = pneg %p80
        %p154 = pneg %p77
        %p155 = pneg %p106
        %p156 = pneg %p103
        %s157 = sand.u32 %s93, 1
        %s158 = scalar_lea.sflag [#allocation3], %s157
        %s159 = sand.u32 %s93, 1
        %s160 = smul.addr %s159, 8
        %s161 = scalar_lea.vmem [#allocation2], %s160
        %p162 = scmp.lt.s32.totalorder %s17, 1
        %s163 = scalar_select %p162, %s17, 1
        %s164 = smul.addr %s163, 8
        %s165 = scalar_lea.vmem %s0, %s164
        %v166 = vld [vmem:[%s165] sm:$0xff]
        %v167 = vld [vmem:[%s1] sm:$0xff]
        %v168 = vld [vmem:[%s1 + $0x8] sm:$0xff]
        %v169 = vld [vmem:[%s1 + $0x10] sm:$0xff]
        %v170 = vld [vmem:[%s1 + $0x18] sm:$0xff]
        %v171 = vld [vmem:[%s2] sm:$0x1]
        %v173 = vlaneseq
        %v174 = vshrl.u32 %v173, 7
        %v175 = vsub.s32 0, %v174
        %v176 = vrot.slane %v171, %v175
        %vm178 = vcmask 261120
        %v180 = vsel %vm178, %v166, 0
        %182 = vmatprep.subr.mxu0 0.0
        %183 = vmatpush1.msra.mxu0 %v167
        %184 = vmatprep.subr.mxu0 0.0
        %185 = vmatpush1.msra.mxu0 %v168
        %186 = vmatprep.subr.mxu0 0.0
        %187 = vmatpush1.msra.mxu0 %v169
        %188 = vmatprep.subr.mxu0 0.0
        %189 = vmatpush1.msra.mxu0 %v170
        %190 = vmatprep.subr.mxu0 0.0
        %191 = vmatpush1.msra.mxu0 0.0
        %192 = vmatprep.subr.mxu0 0.0
        %193 = vmatpush1.msra.mxu0 0.0
        %194 = vmatprep.subr.mxu0 0.0
        %195 = vmatpush1.msra.mxu0 0.0
        %196 = vmatprep.subr.mxu0 0.0
        %197 = vmatpush1.msra.mxu0 0.0
        %198 = vmatprep.subr.mxu0 0.0
        %199 = vmatpush1.msra.mxu0 0.0
        %200 = vmatprep.subr.mxu0 0.0
        %201 = vmatpush1.msra.mxu0 0.0
        %202 = vmatprep.subr.mxu0 0.0
        %203 = vmatpush1.msra.mxu0 0.0
        %204 = vmatprep.subr.mxu0 0.0
        %205 = vmatpush1.msra.mxu0 0.0
        %206 = vmatprep.subr.mxu0 0.0
        %207 = vmatpush1.msra.mxu0 0.0
        %208 = vmatprep.subr.mxu0 0.0
        %209 = vmatpush1.msra.mxu0 0.0
        %210 = vmatprep.subr.mxu0 0.0
        %211 = vmatpush1.msra.mxu0 0.0
        %212 = vmatprep.subr.mxu0 0.0
        %213 = vmatpush1.msra.mxu0 0.0
        %214 = vmatprep.subr.mxu0 0.0
        %215 = vmatpush1.msra.mxu0 0.0
        %216 = vmatprep.subr.mxu0 0.0
        %217 = vmatpush1.msra.mxu0 0.0
        %218 = vmatprep.subr.mxu0 0.0
        %219 = vmatpush1.msra.mxu0 0.0
        %220 = vmatprep.subr.mxu0 0.0
        %221 = vmatpush1.msra.mxu0 0.0
        %222 = vmatprep.subr.mxu0 0.0
        %223 = vmatpush1.msra.mxu0 0.0
        %224 = vmatprep.subr.mxu0 0.0
        %225 = vmatpush1.msra.mxu0 0.0
        %226 = vmatprep.subr.mxu0 0.0
        %227 = vmatpush1.msra.mxu0 0.0
        %228 = vmatprep.subr.mxu0 0.0
        %229 = vmatpush1.msra.mxu0 0.0
        %230 = vmatprep.subr.mxu0 0.0
        %231 = vmatpush1.msra.mxu0 0.0
        %232 = vmatprep.subr.mxu0 0.0
        %233 = vmatpush1.msra.mxu0 0.0
        %234 = vmatprep.subr.mxu0 0.0
        %235 = vmatpush1.msra.mxu0 0.0
        %236 = vmatprep.subr.mxu0 0.0
        %237 = vmatpush1.msra.mxu0 0.0
        %238 = vmatprep.subr.mxu0 0.0
        %239 = vmatpush1.msra.mxu0 0.0
        %240 = vmatprep.subr.mxu0 0.0
        %241 = vmatpush1.msra.mxu0 0.0
        %242 = vmatprep.subr.mxu0 0.0
        %243 = vmatpush1.msra.mxu0 0.0
        %244 = vmatprep.subr.mxu0 0.0
        %245 = vmatpush1.msra.mxu0 0.0
        %246 = vmatprep.mubr.f32.mxu0 0.0
        %247 = vmatmul.mubr.f32.gmra.mrb[0].mxu0 %v180
        %v248 = vpop.f32.mrb[0].mxu0
        %v249 = vadd.f32 %v176, %v248
        %v250 = vpop.f32.mrb[0].mxu0
        %251 = vdwg.mxu0
        %vm252 = vcmask 130048
        %253 = vst.msk [vmem:[%s161] sm:$0xff] %vm252, %v249
        %s254 = sand.u32 %s93, 1
        %s255 = scalar_lea.sflag [#allocation3], %s254
        %s256 = sand.u32 %s93, 1
        %s257 = smul.addr %s256, 8
        %s258 = scalar_lea.vmem [#allocation2], %s257
        // Predicated region
        $region33: #{diag_gaussian_forward.1} parent=31 // pred_check
          %p259 = pneg %p103
        $region34: #{diag_gaussian_forward.1} parent=31 // pred_check_branch
          %261 = sbr.rel (%p259) target = $region36
        $region35: #{diag_gaussian_forward.1} parent=31 // pred_region
          %s263 = ssub.s32 128, 128
          %264 = vsyncadd %s255, %s263
          %s265 = smul.addr %s17, 128
          %s266 = scalar_lea.hbm %s3, %s265
          %s268 = sshll.u32 %s258, 4
          %s269 = int_to_ptr.vmem [resolvable:$true] %s268
          %271 = dma.vmem_to_hbm [thread:$0]  %s269, 128, %s266, %s255
        $region36: #{diag_gaussian_forward.1} parent=31 // pred_fallthru
          _
      $region32: #{diag_gaussian_forward.1} parent=5 // pred_fallthru
        _
      %p272 = scmp.le.s32.totalorder 2, %s12
      // Predicated region
      $region37: #{diag_gaussian_forward.1} parent=5 // pred_check
        %p273 = pneg %p272
      $region38: #{diag_gaussian_forward.1} parent=5 // pred_check_branch
        %275 = sbr.rel (%p273) target = $region40
      $region39: #{diag_gaussian_forward.1} parent=5 // pred_region
        %s276 = ssub.s32 %s12, 2
        // Predicated region
        $region41: #{diag_gaussian_forward.1} parent=39 // pred_check
          %p277 = pneg %p109
        $region42: #{diag_gaussian_forward.1} parent=39 // pred_check_branch
          %279 = sbr.rel (%p277) target = $region44
        $region43: #{diag_gaussian_forward.1} parent=39 // pred_region
          %s280 = sand.u32 %s94, 1
          %s281 = scalar_lea.sflag [#allocation3], %s280
          %s282 = sand.u32 %s94, 1
          %s283 = smul.addr %s282, 8
          %s284 = scalar_lea.vmem [#allocation2], %s283
          %285 = dma.done %s281, 128
        $region44: #{diag_gaussian_forward.1} parent=39 // pred_fallthru
          _
      $region40: #{diag_gaussian_forward.1} parent=5 // pred_fallthru
        _
    $region6: #{diag_gaussian_forward.1} parent=1 // loop_footer
      %s16 = sadd.s32 1, %s12
    $region7: #{diag_gaussian_forward.1} parent=1 // loop_footer_branch
      %11 = sbr.rel target = $region3
    $region8: #{diag_gaussian_forward.1} parent=1 // loop_exit
      _
    %286 = vsyncpa [#allocation3], 1
    %s287 = scalar_lea.sflag [#allocation3], 1
    %288 = vsyncpa %s287, 1

</llo_original>
